<compile_context>
chip_gen: v7x
topology: tpu7x:2x2x1
jax: 0.10.0
libtpu: 0.0.40
codegen_flags: <defaults>
</compile_context>

<pallas_src>
import functools
import math

import jax
import jax.numpy as jnp
from jax.experimental import pallas as pl
from jax.experimental.pallas import tpu as pltpu

_LANE = 128      # lane width (last dim)
_SUBLANE = 8     # sublane width (second-to-last dim)


def _round_up(x, m):
    return (x + m - 1) // m * m


# ----------------------------------------------------------------------------
# Fused kernel: all Linear (+ activation) layers chained in one body.
# ----------------------------------------------------------------------------
def _fused_mlp_kernel(*refs, num_layers, final_act):
    """refs = (x_ref, w0_ref, b0_ref, ..., w{L-1}_ref, b{L-1}_ref, o_ref).

    LipSwish's 0.909 has been folded into the *following* layer's weight at
    parameter-prep time, so the hidden activation here is plain silu.
    """
    x_ref = refs[0]
    o_ref = refs[-1]
    wb = refs[1:-1]

    h = x_ref[...].astype(jnp.float32)
    for i in range(num_layers):
        w = wb[2 * i][...]
        b = wb[2 * i + 1][...]          # (1, N) f32, broadcasts over rows
        # Cast activations to the weight dtype for the MXU (bf16 on v6e/v7x if
        # params were prepared that way); accumulate in f32.
        h = jnp.dot(h.astype(w.dtype), w, preferred_element_type=jnp.float32) + b
        if i < num_layers - 1:
            h = h * jax.nn.sigmoid(h)   # silu; 0.909 folded into next W
    if final_act == "tanh":
        h = jnp.tanh(h)
    o_ref[...] = h.astype(o_ref.dtype)


# ----------------------------------------------------------------------------
# Parameter init (torch.nn.Linear-style) and prep (fold + pad).
# ----------------------------------------------------------------------------
def init_mlp_params(key, in_size, out_size, mlp_size, num_layers):
    """W, b ~ U(-1/sqrt(fan_in), 1/sqrt(fan_in)); weights stored as (in, out)."""
    sizes = [in_size] + [mlp_size] * num_layers + [out_size]
    params = []
    for i in range(len(sizes) - 1):
        fan_in, fan_out = sizes[i], sizes[i + 1]
        bound = 1.0 / math.sqrt(fan_in)
        key, kw, kb = jax.random.split(key, 3)
        w = jax.random.uniform(kw, (fan_in, fan_out), jnp.float32, -bound, bound)
        b = jax.random.uniform(kb, (1, fan_out), jnp.float32, -bound, bound)
        params.append((w, b))
    return params


def prepare_params(params, weight_dtype=jnp.float32):
    """Offline prep: fold each LipSwish's 0.909 into the NEXT layer's weight
    (every LipSwish feeds a Linear directly, so this is exact algebraically),
    then zero-pad feature dims to multiples of 128 for lane-dense tiles.
    Biases are kept in f32. Use weight_dtype=jnp.bfloat16 on v6e/v7x at
    production sizes for full MXU throughput."""
    prepped = []
    for i, (w, b) in enumerate(params):
        w = jnp.asarray(w, jnp.float32)
        b = jnp.asarray(b, jnp.float32).reshape(1, -1)
        if i > 0:
            w = w * jnp.float32(0.909)   # fold preceding LipSwish scale
        k, n = w.shape
        kp, np_ = _round_up(k, _LANE), _round_up(n, _LANE)
        w_pad = jnp.zeros((kp, np_), weight_dtype).at[:k, :n].set(
            w.astype(weight_dtype))
        b_pad = jnp.zeros((1, np_), jnp.float32).at[:, :n].set(b)
        prepped.append((w_pad, b_pad))
    return prepped


# ----------------------------------------------------------------------------
# Forward pass: one fused pallas_call, grid tiled over batch only.
# ----------------------------------------------------------------------------
def mlp_forward(x, prepped_params, out_size, tanh, *, tile_m=256):
    B, in_size = x.shape
    Kp = prepped_params[0][0].shape[0]
    Np = prepped_params[-1][0].shape[1]
    num_layers = len(prepped_params)

    # Batch tiling: tm is a multiple of 8 sublanes, capped at tile_m.
    tm = min(tile_m, _round_up(B, _SUBLANE))
    Bp = _round_up(B, tm)

    x_pad = jnp.zeros((Bp, Kp), jnp.float32).at[:B, :in_size].set(
        x.astype(jnp.float32))

    # x / out are tiled over the batch axis; weights & biases return block
    # (0, 0) for every grid step -> they stay resident in VMEM across tiles.
    in_specs = [pl.BlockSpec((tm, Kp), lambda i: (i, 0))]
    flat_wb = []
    for (w, b) in prepped_params:
        kw, nw = w.shape
        in_specs.append(pl.BlockSpec((kw, nw), lambda i: (0, 0)))
        in_specs.append(pl.BlockSpec((1, nw), lambda i: (0, 0)))
        flat_wb.extend((w, b))

    kernel = functools.partial(
        _fused_mlp_kernel,
        num_layers=num_layers,
        final_act="tanh" if tanh else "none",
    )

    out_pad = pl.pallas_call(
        kernel,
        out_shape=jax.ShapeDtypeStruct((Bp, Np), jnp.float32),
        grid=(Bp // tm,),
        in_specs=in_specs,
        out_specs=pl.BlockSpec((tm, Np), lambda i: (i, 0)),
        compiler_params=pltpu.CompilerParams(
            # Batch axis is embarrassingly parallel -> both v7x TensorCores.
            dimension_semantics=("parallel",),
        ),
    )(x_pad, *flat_wb)

    # TODO(synk): for mlp_size >= ~4k, re-budget resident-weight VMEM for
    # v7x's 64 MiB (split the fusion or tile the hidden dim).
    return out_pad[:B, :out_size]


# ----------------------------------------------------------------------------
# Plain-JAX reference on the ORIGINAL (unfolded, unpadded) parameters.
# ----------------------------------------------------------------------------
def mlp_reference(x, params, tanh):
    n = len(params)
    h = x
    for i, (w, b) in enumerate(params):
        h = h @ w + b
        if i < n - 1:
            h = 0.909 * h * jax.nn.sigmoid(h)
        elif tanh:
            h = jnp.tanh(h)
    return h


if __name__ == "__main__":
    # Small shapes consistent with the module's forward: x is (batch, in_size).
    batch, in_size, out_size, mlp_size, num_layers = 8, 16, 8, 32, 3
    use_tanh = True

    key = jax.random.PRNGKey(0)
    kx, kp = jax.random.split(key)
    x = jax.random.normal(kx, (batch, in_size), jnp.float32)
    params = init_mlp_params(kp, in_size, out_size, mlp_size, num_layers)

    prepped = prepare_params(params)  # fold 0.909 + pad to lane-dense tiles
    out = mlp_forward(x, prepped, out_size, use_tanh)
    out = jax.block_until_ready(out)

    ref = mlp_reference(x, params, use_tanh)
    assert out.shape == (batch, out_size)
    assert jnp.allclose(out, ref, atol=1e-4, rtol=1e-4), "mismatch vs reference"

    print("KERNEL_OK")
</pallas_src>

<mosaic_0001>
module attributes {stable_mosaic.version = 11 : i64} {
  func.func @_fused_mlp_kernel(%arg0: i32, %arg1: memref<8x128xf32, #tpu.memory_space<vmem>>, %arg2: memref<128x128xf32, #tpu.memory_space<vmem>>, %arg3: memref<1x128xf32, #tpu.memory_space<vmem>>, %arg4: memref<128x128xf32, #tpu.memory_space<vmem>>, %arg5: memref<1x128xf32, #tpu.memory_space<vmem>>, %arg6: memref<128x128xf32, #tpu.memory_space<vmem>>, %arg7: memref<1x128xf32, #tpu.memory_space<vmem>>, %arg8: memref<128x128xf32, #tpu.memory_space<vmem>>, %arg9: memref<1x128xf32, #tpu.memory_space<vmem>>, %arg10: memref<8x128xf32, #tpu.memory_space<vmem>>) attributes {dimension_semantics = [#tpu.dimension_semantics<parallel>], iteration_bounds = array<i64: 1>, scalar_prefetch = 0 : i64, scratch_operands = 0 : i64, tpu.core_type = #tpu.core_type<tc>, window_params = [{transform_indices = @transform_0, window_bounds = array<i64: 8, 128>}, {pipeline_mode = #tpu.pipeline_mode<synchronous>, transform_indices = @transform_1, window_bounds = array<i64: 128, 128>}, {pipeline_mode = #tpu.pipeline_mode<synchronous>, transform_indices = @transform_2, window_bounds = array<i64: 1, 128>}, {pipeline_mode = #tpu.pipeline_mode<synchronous>, transform_indices = @transform_3, window_bounds = array<i64: 128, 128>}, {pipeline_mode = #tpu.pipeline_mode<synchronous>, transform_indices = @transform_4, window_bounds = array<i64: 1, 128>}, {pipeline_mode = #tpu.pipeline_mode<synchronous>, transform_indices = @transform_5, window_bounds = array<i64: 128, 128>}, {pipeline_mode = #tpu.pipeline_mode<synchronous>, transform_indices = @transform_6, window_bounds = array<i64: 1, 128>}, {pipeline_mode = #tpu.pipeline_mode<synchronous>, transform_indices = @transform_7, window_bounds = array<i64: 128, 128>}, {pipeline_mode = #tpu.pipeline_mode<synchronous>, transform_indices = @transform_8, window_bounds = array<i64: 1, 128>}, {transform_indices = @transform_9, window_bounds = array<i64: 8, 128>}]} {
    %c0 = arith.constant 0 : index
    %c0_0 = arith.constant 0 : index
    %0 = vector.load %arg1[%c0, %c0_0] : memref<8x128xf32, #tpu.memory_space<vmem>>, vector<8x128xf32>
    %c0_1 = arith.constant 0 : index
    %c0_2 = arith.constant 0 : index
    %1 = vector.load %arg2[%c0_1, %c0_2] : memref<128x128xf32, #tpu.memory_space<vmem>>, vector<128x128xf32>
    %c0_3 = arith.constant 0 : index
    %c0_4 = arith.constant 0 : index
    %2 = vector.load %arg3[%c0_3, %c0_4] : memref<1x128xf32, #tpu.memory_space<vmem>>, vector<1x128xf32>
    %cst = arith.constant dense<0.000000e+00> : vector<8x128xf32>
    %3 = tpu.matmul %0, %1, %cst {dimension_numbers = #tpu.dot_dimension_numbers<[1], [0], [0], [1], [0, 0, 1, 1], [], []>} : vector<8x128xf32>, vector<128x128xf32>, vector<8x128xf32> -> vector<8x128xf32>
    %4 = vector.broadcast %2 : vector<1x128xf32> to vector<8x128xf32>
    %5 = arith.addf %3, %4 : vector<8x128xf32>
    %6 = arith.negf %5 : vector<8x128xf32>
    %7 = math.exp %6 : vector<8x128xf32>
    %cst_5 = arith.constant 1.000000e+00 : f32
    %8 = vector.broadcast %cst_5 : f32 to vector<8x128xf32>
    %9 = arith.addf %8, %7 : vector<8x128xf32>
    %10 = arith.divf %8, %9 : vector<8x128xf32>
    %11 = arith.mulf %5, %10 : vector<8x128xf32>
    %c0_6 = arith.constant 0 : index
    %c0_7 = arith.constant 0 : index
    %12 = vector.load %arg4[%c0_6, %c0_7] : memref<128x128xf32, #tpu.memory_space<vmem>>, vector<128x128xf32>
    %c0_8 = arith.constant 0 : index
    %c0_9 = arith.constant 0 : index
    %13 = vector.load %arg5[%c0_8, %c0_9] : memref<1x128xf32, #tpu.memory_space<vmem>>, vector<1x128xf32>
    %cst_10 = arith.constant dense<0.000000e+00> : vector<8x128xf32>
    %14 = tpu.matmul %11, %12, %cst_10 {dimension_numbers = #tpu.dot_dimension_numbers<[1], [0], [0], [1], [0, 0, 1, 1], [], []>} : vector<8x128xf32>, vector<128x128xf32>, vector<8x128xf32> -> vector<8x128xf32>
    %15 = vector.broadcast %13 : vector<1x128xf32> to vector<8x128xf32>
    %16 = arith.addf %14, %15 : vector<8x128xf32>
    %17 = arith.negf %16 : vector<8x128xf32>
    %18 = math.exp %17 : vector<8x128xf32>
    %cst_11 = arith.constant 1.000000e+00 : f32
    %19 = vector.broadcast %cst_11 : f32 to vector<8x128xf32>
    %20 = arith.addf %19, %18 : vector<8x128xf32>
    %21 = arith.divf %19, %20 : vector<8x128xf32>
    %22 = arith.mulf %16, %21 : vector<8x128xf32>
    %c0_12 = arith.constant 0 : index
    %c0_13 = arith.constant 0 : index
    %23 = vector.load %arg6[%c0_12, %c0_13] : memref<128x128xf32, #tpu.memory_space<vmem>>, vector<128x128xf32>
    %c0_14 = arith.constant 0 : index
    %c0_15 = arith.constant 0 : index
    %24 = vector.load %arg7[%c0_14, %c0_15] : memref<1x128xf32, #tpu.memory_space<vmem>>, vector<1x128xf32>
    %cst_16 = arith.constant dense<0.000000e+00> : vector<8x128xf32>
    %25 = tpu.matmul %22, %23, %cst_16 {dimension_numbers = #tpu.dot_dimension_numbers<[1], [0], [0], [1], [0, 0, 1, 1], [], []>} : vector<8x128xf32>, vector<128x128xf32>, vector<8x128xf32> -> vector<8x128xf32>
    %26 = vector.broadcast %24 : vector<1x128xf32> to vector<8x128xf32>
    %27 = arith.addf %25, %26 : vector<8x128xf32>
    %28 = arith.negf %27 : vector<8x128xf32>
    %29 = math.exp %28 : vector<8x128xf32>
    %cst_17 = arith.constant 1.000000e+00 : f32
    %30 = vector.broadcast %cst_17 : f32 to vector<8x128xf32>
    %31 = arith.addf %30, %29 : vector<8x128xf32>
    %32 = arith.divf %30, %31 : vector<8x128xf32>
    %33 = arith.mulf %27, %32 : vector<8x128xf32>
    %c0_18 = arith.constant 0 : index
    %c0_19 = arith.constant 0 : index
    %34 = vector.load %arg8[%c0_18, %c0_19] : memref<128x128xf32, #tpu.memory_space<vmem>>, vector<128x128xf32>
    %c0_20 = arith.constant 0 : index
    %c0_21 = arith.constant 0 : index
    %35 = vector.load %arg9[%c0_20, %c0_21] : memref<1x128xf32, #tpu.memory_space<vmem>>, vector<1x128xf32>
    %cst_22 = arith.constant dense<0.000000e+00> : vector<8x128xf32>
    %36 = tpu.matmul %33, %34, %cst_22 {dimension_numbers = #tpu.dot_dimension_numbers<[1], [0], [0], [1], [0, 0, 1, 1], [], []>} : vector<8x128xf32>, vector<128x128xf32>, vector<8x128xf32> -> vector<8x128xf32>
    %37 = vector.broadcast %35 : vector<1x128xf32> to vector<8x128xf32>
    %38 = arith.addf %36, %37 : vector<8x128xf32>
    %39 = math.tanh %38 : vector<8x128xf32>
    %c0_23 = arith.constant 0 : index
    %c0_24 = arith.constant 0 : index
    %40 = vector.load %arg10[%c0_23, %c0_24] : memref<8x128xf32, #tpu.memory_space<vmem>>, vector<8x128xf32>
    tpu.vector_store %arg10[%c0_23, %c0_24], %39 {strides = array<i32>} : memref<8x128xf32, #tpu.memory_space<vmem>>, vector<8x128xf32>,
    return
  }
  func.func @transform_0(%arg0: i32) -> (i32, i32) {
    %c0_i32 = arith.constant 0 : i32
    %c0_i32_0 = arith.constant 0 : i32
    return %arg0, %c0_i32 : i32, i32
  }
  func.func @transform_1(%arg0: i32) -> (i32, i32) {
    %c0_i32 = arith.constant 0 : i32
    %c0_i32_0 = arith.constant 0 : i32
    %c0_i32_1 = arith.constant 0 : i32
    return %c0_i32, %c0_i32_0 : i32, i32
  }
  func.func @transform_2(%arg0: i32) -> (i32, i32) {
    %c0_i32 = arith.constant 0 : i32
    %c0_i32_0 = arith.constant 0 : i32
    %c0_i32_1 = arith.constant 0 : i32
    return %c0_i32, %c0_i32_0 : i32, i32
  }
  func.func @transform_3(%arg0: i32) -> (i32, i32) {
    %c0_i32 = arith.constant 0 : i32
    %c0_i32_0 = arith.constant 0 : i32
    %c0_i32_1 = arith.constant 0 : i32
    return %c0_i32, %c0_i32_0 : i32, i32
  }
  func.func @transform_4(%arg0: i32) -> (i32, i32) {
    %c0_i32 = arith.constant 0 : i32
    %c0_i32_0 = arith.constant 0 : i32
    %c0_i32_1 = arith.constant 0 : i32
    return %c0_i32, %c0_i32_0 : i32, i32
  }
  func.func @transform_5(%arg0: i32) -> (i32, i32) {
    %c0_i32 = arith.constant 0 : i32
    %c0_i32_0 = arith.constant 0 : i32
    %c0_i32_1 = arith.constant 0 : i32
    return %c0_i32, %c0_i32_0 : i32, i32
  }
  func.func @transform_6(%arg0: i32) -> (i32, i32) {
    %c0_i32 = arith.constant 0 : i32
    %c0_i32_0 = arith.constant 0 : i32
    %c0_i32_1 = arith.constant 0 : i32
    return %c0_i32, %c0_i32_0 : i32, i32
  }
  func.func @transform_7(%arg0: i32) -> (i32, i32) {
    %c0_i32 = arith.constant 0 : i32
    %c0_i32_0 = arith.constant 0 : i32
    %c0_i32_1 = arith.constant 0 : i32
    return %c0_i32, %c0_i32_0 : i32, i32
  }
  func.func @transform_8(%arg0: i32) -> (i32, i32) {
    %c0_i32 = arith.constant 0 : i32
    %c0_i32_0 = arith.constant 0 : i32
    %c0_i32_1 = arith.constant 0 : i32
    return %c0_i32, %c0_i32_0 : i32, i32
  }
  func.func @transform_9(%arg0: i32) -> (i32, i32) {
    %c0_i32 = arith.constant 0 : i32
    %c0_i32_0 = arith.constant 0 : i32
    return %arg0, %c0_i32 : i32, i32
  }
}

</mosaic_0001>

<llo_original>
// kernel: tpu_custom_call.1
$region0: #{tpu_custom_call.1}
  #allocation0 [shape = 'u32[]', space=smem, size = 0x4, offset = 0x4, fixed_abs, tag = 'smem constant byte address 0x4 - core index']
  #allocation1 [shape = 'u32[144,128]{1,0:T(1,128)}', space=vmem, size = 0x12000, scoped, tag = 'internal scratch']
  %s0 = inlined_call_operand.hbm [shape: f32[8,128], index: 0, kind: input, shape index: {}]
  %s1 = inlined_call_operand.hbm [shape: f32[128,128], index: 1, kind: input, shape index: {}]
  %s2 = inlined_call_operand.vmem [shape: f32[1,128], index: 2, kind: input, shape index: {}]
  %s3 = inlined_call_operand.hbm [shape: f32[128,128], index: 3, kind: input, shape index: {}]
  %s4 = inlined_call_operand.vmem [shape: f32[1,128], index: 4, kind: input, shape index: {}]
  %s5 = inlined_call_operand.hbm [shape: f32[128,128], index: 5, kind: input, shape index: {}]
  %s6 = inlined_call_operand.vmem [shape: f32[1,128], index: 6, kind: input, shape index: {}]
  %s7 = inlined_call_operand.hbm [shape: f32[128,128], index: 7, kind: input, shape index: {}]
  %s8 = inlined_call_operand.vmem [shape: f32[1,128], index: 8, kind: input, shape index: {}]
  %s9 = inlined_call_operand.hbm [shape: f32[8,128], index: 9, kind: output, shape index: {}]
  %s10 = sld [smem:[#allocation0]]
  $region66: #{tpu_custom_call.1} parent=0
    _
  %s12 = ssub.s32 1, %s10
  %s13 = scalar_select 0, %s12, %s10
  $region1: #{tpu_custom_call.1} parent=0
    #allocation2 [shape = 'u8[4096]{0}', space=vmem, size = 0x1000, scoped, tag = 'input window, operand 0, single buffered']
    #allocation3 [shape = 's32[1]{0}', space=sflag, size = 0x4, scoped, tag = 'scoped memory for tpu_custom_call.1']
    #allocation4 [shape = 's32[1]{0}', space=sflag, size = 0x4, scoped, tag = 'scoped memory for tpu_custom_call.1']
    #allocation5 [shape = 'u8[65536]{0}', space=vmem, size = 0x10000, scoped, tag = 'input window, operand 1, single buffered']
    #allocation6 [shape = 's32[1]{0}', space=sflag, size = 0x4, scoped, tag = 'scoped memory for tpu_custom_call.1']
    #allocation7 [shape = 'u8[65536]{0}', space=vmem, size = 0x10000, scoped, tag = 'input window, operand 3, single buffered']
    #allocation8 [shape = 'u8[65536]{0}', space=vmem, size = 0x10000, scoped, tag = 'input window, operand 5, single buffered']
    #allocation9 [shape = 's32[1]{0}', space=sflag, size = 0x4, scoped, tag = 'scoped memory for tpu_custom_call.1']
    #allocation10 [shape = 'u8[65536]{0}', space=vmem, size = 0x10000, scoped, tag = 'input window, operand 7, single buffered']
    #allocation11 [shape = 'u8[4096]{0}', space=vmem, size = 0x1000, scoped, tag = 'output window, operand 0, single buffered']
    %14 = vsyncpa [#allocation3], 0
    %15 = vsyncpa [#allocation6], 0
    %16 = vsyncpa [#allocation9], 0
    %17 = vsyncpa [#allocation4], 0
    // Predicated region
    $region2: #{tpu_custom_call.1} parent=1 // pred_check
      _
    $region3: #{tpu_custom_call.1} parent=1 // pred_check_branch
      %19 = sbr.rel (0) target = $region5
    $region4: #{tpu_custom_call.1} parent=1 // pred_region
      %s21 = ssub.s32 128, 128
      %22 = vsyncadd [#allocation3], %s21
      %s24 = sshll.u32 [#allocation2], 4
      %s25 = int_to_ptr.vmem [resolvable:$true] %s24
      %27 = dma.hbm_to_vmem [thread:$0]  %s0, 128, %s25, [#allocation3]
    $region5: #{tpu_custom_call.1} parent=1 // pred_fallthru
      _
    // Predicated region
    $region6: #{tpu_custom_call.1} parent=1 // pred_check
      _
    $region7: #{tpu_custom_call.1} parent=1 // pred_check_branch
      %29 = sbr.rel (0) target = $region9
    $region8: #{tpu_custom_call.1} parent=1 // pred_region
      %s31 = ssub.s32 2048, 2048
      %32 = vsyncadd [#allocation6], %s31
      %s33 = sshll.u32 [#allocation5], 4
      %s34 = int_to_ptr.vmem [resolvable:$true] %s33
      %39 = dma.hbm_to_vmem [thread:$0]  %s1, 2048, %s34, [#allocation6], 128, 128, 8
    $region9: #{tpu_custom_call.1} parent=1 // pred_fallthru
      _
    // Predicated region
    $region10: #{tpu_custom_call.1} parent=1 // pred_check
      _
    $region11: #{tpu_custom_call.1} parent=1 // pred_check_branch
      %41 = sbr.rel (0) target = $region13
    $region12: #{tpu_custom_call.1} parent=1 // pred_region
      _
    $region13: #{tpu_custom_call.1} parent=1 // pred_fallthru
      _
    // Predicated region
    $region14: #{tpu_custom_call.1} parent=1 // pred_check
      _
    $region15: #{tpu_custom_call.1} parent=1 // pred_check_branch
      %43 = sbr.rel (0) target = $region17
    $region16: #{tpu_custom_call.1} parent=1 // pred_region
      %s45 = ssub.s32 2048, 2048
      %46 = vsyncadd [#allocation6], %s45
      %s47 = sshll.u32 [#allocation7], 4
      %s48 = int_to_ptr.vmem [resolvable:$true] %s47
      %53 = dma.hbm_to_vmem [thread:$0]  %s3, 2048, %s48, [#allocation6], 128, 128, 8
    $region17: #{tpu_custom_call.1} parent=1 // pred_fallthru
      _
    // Predicated region
    $region18: #{tpu_custom_call.1} parent=1 // pred_check
      _
    $region19: #{tpu_custom_call.1} parent=1 // pred_check_branch
      %55 = sbr.rel (0) target = $region21
    $region20: #{tpu_custom_call.1} parent=1 // pred_region
      _
    $region21: #{tpu_custom_call.1} parent=1 // pred_fallthru
      _
    // Predicated region
    $region22: #{tpu_custom_call.1} parent=1 // pred_check
      _
    $region23: #{tpu_custom_call.1} parent=1 // pred_check_branch
      %57 = sbr.rel (0) target = $region25
    $region24: #{tpu_custom_call.1} parent=1 // pred_region
      %s59 = ssub.s32 2048, 2048
      %60 = vsyncadd [#allocation9], %s59
      %s61 = sshll.u32 [#allocation8], 4
      %s62 = int_to_ptr.vmem [resolvable:$true] %s61
      %67 = dma.hbm_to_vmem [thread:$0]  %s5, 2048, %s62, [#allocation9], 128, 128, 8
    $region25: #{tpu_custom_call.1} parent=1 // pred_fallthru
      _
    // Predicated region
    $region26: #{tpu_custom_call.1} parent=1 // pred_check
      _
    $region27: #{tpu_custom_call.1} parent=1 // pred_check_branch
      %69 = sbr.rel (0) target = $region29
    $region28: #{tpu_custom_call.1} parent=1 // pred_region
      _
    $region29: #{tpu_custom_call.1} parent=1 // pred_fallthru
      _
    // Predicated region
    $region30: #{tpu_custom_call.1} parent=1 // pred_check
      _
    $region31: #{tpu_custom_call.1} parent=1 // pred_check_branch
      %71 = sbr.rel (0) target = $region33
    $region32: #{tpu_custom_call.1} parent=1 // pred_region
      %s73 = ssub.s32 2048, 2048
      %74 = vsyncadd [#allocation9], %s73
      %s75 = sshll.u32 [#allocation10], 4
      %s76 = int_to_ptr.vmem [resolvable:$true] %s75
      %81 = dma.hbm_to_vmem [thread:$0]  %s7, 2048, %s76, [#allocation9], 128, 128, 8
    $region33: #{tpu_custom_call.1} parent=1 // pred_fallthru
      _
    // Predicated region
    $region34: #{tpu_custom_call.1} parent=1 // pred_check
      _
    $region35: #{tpu_custom_call.1} parent=1 // pred_check_branch
      %83 = sbr.rel (0) target = $region37
    $region36: #{tpu_custom_call.1} parent=1 // pred_region
      _
    $region37: #{tpu_custom_call.1} parent=1 // pred_fallthru
      _
    // Predicated region
    $region38: #{tpu_custom_call.1} parent=1 // pred_check
      _
    $region39: #{tpu_custom_call.1} parent=1 // pred_check_branch
      %85 = sbr.rel (0) target = $region41
    $region40: #{tpu_custom_call.1} parent=1 // pred_region
      %86 = dma.done [#allocation3], 128
    $region41: #{tpu_custom_call.1} parent=1 // pred_fallthru
      _
    // Predicated region
    $region42: #{tpu_custom_call.1} parent=1 // pred_check
      _
    $region43: #{tpu_custom_call.1} parent=1 // pred_check_branch
      %88 = sbr.rel (0) target = $region45
    $region44: #{tpu_custom_call.1} parent=1 // pred_region
      %89 = dma.done [#allocation6], 2048
    $region45: #{tpu_custom_call.1} parent=1 // pred_fallthru
      _
    // Predicated region
    $region46: #{tpu_custom_call.1} parent=1 // pred_check
      _
    $region47: #{tpu_custom_call.1} parent=1 // pred_check_branch
      %91 = sbr.rel (0) target = $region49
    $region48: #{tpu_custom_call.1} parent=1 // pred_region
      %92 = dma.done [#allocation6], 2048
    $region49: #{tpu_custom_call.1} parent=1 // pred_fallthru
      _
    // Predicated region
    $region50: #{tpu_custom_call.1} parent=1 // pred_check
      _
    $region51: #{tpu_custom_call.1} parent=1 // pred_check_branch
      %94 = sbr.rel (0) target = $region53
    $region52: #{tpu_custom_call.1} parent=1 // pred_region
      %95 = dma.done [#allocation9], 2048
    $region53: #{tpu_custom_call.1} parent=1 // pred_fallthru
      _
    // Predicated region
    $region54: #{tpu_custom_call.1} parent=1 // pred_check
      _
    $region55: #{tpu_custom_call.1} parent=1 // pred_check_branch
      %97 = sbr.rel (0) target = $region57
    $region56: #{tpu_custom_call.1} parent=1 // pred_region
      %98 = dma.done [#allocation9], 2048
    $region57: #{tpu_custom_call.1} parent=1 // pred_fallthru
      _
    %v99 = vld [vmem:[#allocation2] sm:$0xff]
    %v100 = vld [vmem:[#allocation5] sm:$0xff]
    %v101 = vld [vmem:[#allocation5 + $0x8] sm:$0xff]
    %v102 = vld [vmem:[#allocation5 + $0x10] sm:$0xff]
    %v103 = vld [vmem:[#allocation5 + $0x18] sm:$0xff]
    %v104 = vld [vmem:[#allocation5 + $0x20] sm:$0xff]
    %v105 = vld [vmem:[#allocation5 + $0x28] sm:$0xff]
    %v106 = vld [vmem:[#allocation5 + $0x30] sm:$0xff]
    %v107 = vld [vmem:[#allocation5 + $0x38] sm:$0xff]
    %v108 = vld [vmem:[#allocation5 + $0x40] sm:$0xff]
    %v109 = vld [vmem:[#allocation5 + $0x48] sm:$0xff]
    %v110 = vld [vmem:[#allocation5 + $0x50] sm:$0xff]
    %v111 = vld [vmem:[#allocation5 + $0x58] sm:$0xff]
    %v112 = vld [vmem:[#allocation5 + $0x60] sm:$0xff]
    %v113 = vld [vmem:[#allocation5 + $0x68] sm:$0xff]
    %v114 = vld [vmem:[#allocation5 + $0x70] sm:$0xff]
    %v115 = vld [vmem:[#allocation5 + $0x78] sm:$0xff]
    %v116 = vld [vmem:[%s2] sm:$0x1]
    %v118 = vlaneseq
    %v119 = vshrl.u32 %v118, 7
    %v120 = vsub.s32 0, %v119
    %v121 = vrot.slane %v116, %v120
    %123 = vmatprep.subr.mxu0 0.0
    %124 = vmatpush1.msra.mxu0 %v100
    %125 = vmatprep.subr.mxu0 0.0
    %126 = vmatpush1.msra.mxu0 %v101
    %127 = vmatprep.subr.mxu0 0.0
    %128 = vmatpush1.msra.mxu0 %v102
    %129 = vmatprep.subr.mxu0 0.0
    %130 = vmatpush1.msra.mxu0 %v103
    %131 = vmatprep.subr.mxu0 0.0
    %132 = vmatpush1.msra.mxu0 %v104
    %133 = vmatprep.subr.mxu0 0.0
    %134 = vmatpush1.msra.mxu0 %v105
    %135 = vmatprep.subr.mxu0 0.0
    %136 = vmatpush1.msra.mxu0 %v106
    %137 = vmatprep.subr.mxu0 0.0
    %138 = vmatpush1.msra.mxu0 %v107
    %139 = vmatprep.subr.mxu0 0.0
    %140 = vmatpush1.msra.mxu0 %v108
    %141 = vmatprep.subr.mxu0 0.0
    %142 = vmatpush1.msra.mxu0 %v109
    %143 = vmatprep.subr.mxu0 0.0
    %144 = vmatpush1.msra.mxu0 %v110
    %145 = vmatprep.subr.mxu0 0.0
    %146 = vmatpush1.msra.mxu0 %v111
    %147 = vmatprep.subr.mxu0 0.0
    %148 = vmatpush1.msra.mxu0 %v112
    %149 = vmatprep.subr.mxu0 0.0
    %150 = vmatpush1.msra.mxu0 %v113
    %151 = vmatprep.subr.mxu0 0.0
    %152 = vmatpush1.msra.mxu0 %v114
    %153 = vmatprep.subr.mxu0 0.0
    %154 = vmatpush1.msra.mxu0 %v115
    %155 = vmatprep.subr.mxu0 0.0
    %156 = vmatpush1.msra.mxu0 0.0
    %157 = vmatprep.subr.mxu0 0.0
    %158 = vmatpush1.msra.mxu0 0.0
    %159 = vmatprep.subr.mxu0 0.0
    %160 = vmatpush1.msra.mxu0 0.0
    %161 = vmatprep.subr.mxu0 0.0
    %162 = vmatpush1.msra.mxu0 0.0
    %163 = vmatprep.subr.mxu0 0.0
    %164 = vmatpush1.msra.mxu0 0.0
    %165 = vmatprep.subr.mxu0 0.0
    %166 = vmatpush1.msra.mxu0 0.0
    %167 = vmatprep.subr.mxu0 0.0
    %168 = vmatpush1.msra.mxu0 0.0
    %169 = vmatprep.subr.mxu0 0.0
    %170 = vmatpush1.msra.mxu0 0.0
    %171 = vmatprep.subr.mxu0 0.0
    %172 = vmatpush1.msra.mxu0 0.0
    %173 = vmatprep.subr.mxu0 0.0
    %174 = vmatpush1.msra.mxu0 0.0
    %175 = vmatprep.subr.mxu0 0.0
    %176 = vmatpush1.msra.mxu0 0.0
    %177 = vmatprep.subr.mxu0 0.0
    %178 = vmatpush1.msra.mxu0 0.0
    %179 = vmatprep.subr.mxu0 0.0
    %180 = vmatpush1.msra.mxu0 0.0
    %181 = vmatprep.subr.mxu0 0.0
    %182 = vmatpush1.msra.mxu0 0.0
    %183 = vmatprep.subr.mxu0 0.0
    %184 = vmatpush1.msra.mxu0 0.0
    %185 = vmatprep.subr.mxu0 0.0
    %186 = vmatpush1.msra.mxu0 0.0
    %187 = vmatprep.mubr.f32.mxu0 0.0
    %188 = vmatmul.mubr.f32.gmra.mrb[0].mxu0 %v99
    %v189 = vpop.f32.mrb[0].mxu0
    %v190 = vadd.f32 %v121, %v189
    %v191 = vpop.f32.mrb[0].mxu0
    %192 = vdwg.mxu0
    %v193 = vxor.u32 %v190, 2147483648
    %v194 = vmul.f32 %v193, 1.442695
    %v195 = vpow.pop %v194
    %v196 = vadd.f32 %v195, 1.0
    %v197 = vrcp.pop %v196
    %v198 = vmul.f32 1.0, %v197
    %v199 = vmul.f32 %v190, %v198
    %v200 = vld [vmem:[#allocation7] sm:$0xff]
    %v201 = vld [vmem:[#allocation7 + $0x8] sm:$0xff]
    %v202 = vld [vmem:[#allocation7 + $0x10] sm:$0xff]
    %v203 = vld [vmem:[#allocation7 + $0x18] sm:$0xff]
    %v204 = vld [vmem:[#allocation7 + $0x20] sm:$0xff]
    %v205 = vld [vmem:[#allocation7 + $0x28] sm:$0xff]
    %v206 = vld [vmem:[#allocation7 + $0x30] sm:$0xff]
    %v207 = vld [vmem:[#allocation7 + $0x38] sm:$0xff]
    %v208 = vld [vmem:[#allocation7 + $0x40] sm:$0xff]
    %v209 = vld [vmem:[#allocation7 + $0x48] sm:$0xff]
    %v210 = vld [vmem:[#allocation7 + $0x50] sm:$0xff]
    %v211 = vld [vmem:[#allocation7 + $0x58] sm:$0xff]
    %v212 = vld [vmem:[#allocation7 + $0x60] sm:$0xff]
    %v213 = vld [vmem:[#allocation7 + $0x68] sm:$0xff]
    %v214 = vld [vmem:[#allocation7 + $0x70] sm:$0xff]
    %v215 = vld [vmem:[#allocation7 + $0x78] sm:$0xff]
    %v216 = vld [vmem:[%s4] sm:$0x1]
    %v218 = vlaneseq
    %v219 = vshrl.u32 %v218, 7
    %v220 = vsub.s32 0, %v219
    %v221 = vrot.slane %v216, %v220
    %223 = vmatprep.subr.mxu0 0.0
    %224 = vmatpush1.msra.mxu0 %v200
    %225 = vmatprep.subr.mxu0 0.0
    %226 = vmatpush1.msra.mxu0 %v201
    %227 = vmatprep.subr.mxu0 0.0
    %228 = vmatpush1.msra.mxu0 %v202
    %229 = vmatprep.subr.mxu0 0.0
    %230 = vmatpush1.msra.mxu0 %v203
    %231 = vmatprep.subr.mxu0 0.0
    %232 = vmatpush1.msra.mxu0 %v204
    %233 = vmatprep.subr.mxu0 0.0
    %234 = vmatpush1.msra.mxu0 %v205
    %235 = vmatprep.subr.mxu0 0.0
    %236 = vmatpush1.msra.mxu0 %v206
    %237 = vmatprep.subr.mxu0 0.0
    %238 = vmatpush1.msra.mxu0 %v207
    %239 = vmatprep.subr.mxu0 0.0
    %240 = vmatpush1.msra.mxu0 %v208
    %241 = vmatprep.subr.mxu0 0.0
    %242 = vmatpush1.msra.mxu0 %v209
    %243 = vmatprep.subr.mxu0 0.0
    %244 = vmatpush1.msra.mxu0 %v210
    %245 = vmatprep.subr.mxu0 0.0
    %246 = vmatpush1.msra.mxu0 %v211
    %247 = vmatprep.subr.mxu0 0.0
    %248 = vmatpush1.msra.mxu0 %v212
    %249 = vmatprep.subr.mxu0 0.0
    %250 = vmatpush1.msra.mxu0 %v213
    %251 = vmatprep.subr.mxu0 0.0
    %252 = vmatpush1.msra.mxu0 %v214
    %253 = vmatprep.subr.mxu0 0.0
    %254 = vmatpush1.msra.mxu0 %v215
    %255 = vmatprep.subr.mxu0 0.0
    %256 = vmatpush1.msra.mxu0 0.0
    %257 = vmatprep.subr.mxu0 0.0
    %258 = vmatpush1.msra.mxu0 0.0
    %259 = vmatprep.subr.mxu0 0.0
    %260 = vmatpush1.msra.mxu0 0.0
    %261 = vmatprep.subr.mxu0 0.0
    %262 = vmatpush1.msra.mxu0 0.0
    %263 = vmatprep.subr.mxu0 0.0
    %264 = vmatpush1.msra.mxu0 0.0
    %265 = vmatprep.subr.mxu0 0.0
    %266 = vmatpush1.msra.mxu0 0.0
    %267 = vmatprep.subr.mxu0 0.0
    %268 = vmatpush1.msra.mxu0 0.0
    %269 = vmatprep.subr.mxu0 0.0
    %270 = vmatpush1.msra.mxu0 0.0
    %271 = vmatprep.subr.mxu0 0.0
    %272 = vmatpush1.msra.mxu0 0.0
    %273 = vmatprep.subr.mxu0 0.0
    %274 = vmatpush1.msra.mxu0 0.0
    %275 = vmatprep.subr.mxu0 0.0
    %276 = vmatpush1.msra.mxu0 0.0
    %277 = vmatprep.subr.mxu0 0.0
    %278 = vmatpush1.msra.mxu0 0.0
    %279 = vmatprep.subr.mxu0 0.0
    %280 = vmatpush1.msra.mxu0 0.0
    %281 = vmatprep.subr.mxu0 0.0
    %282 = vmatpush1.msra.mxu0 0.0
    %283 = vmatprep.subr.mxu0 0.0
    %284 = vmatpush1.msra.mxu0 0.0
    %285 = vmatprep.subr.mxu0 0.0
    %286 = vmatpush1.msra.mxu0 0.0
    %287 = vmatprep.mubr.f32.mxu0 0.0
    %288 = vmatmul.mubr.f32.gmra.mrb[0].mxu0 %v199
    %v289 = vpop.f32.mrb[0].mxu0
    %v290 = vadd.f32 %v221, %v289
    %v291 = vpop.f32.mrb[0].mxu0
    %292 = vdwg.mxu0
    %v293 = vxor.u32 %v290, 2147483648
    %v294 = vmul.f32 %v293, 1.442695
    %v295 = vpow.pop %v294
    %v296 = vadd.f32 %v295, 1.0
    %v297 = vrcp.pop %v296
    %v298 = vmul.f32 1.0, %v297
    %v299 = vmul.f32 %v290, %v298
    %v300 = vld [vmem:[#allocation8] sm:$0xff]
    %v301 = vld [vmem:[#allocation8 + $0x8] sm:$0xff]
    %v302 = vld [vmem:[#allocation8 + $0x10] sm:$0xff]
    %v303 = vld [vmem:[#allocation8 + $0x18] sm:$0xff]
    %v304 = vld [vmem:[#allocation8 + $0x20] sm:$0xff]
    %v305 = vld [vmem:[#allocation8 + $0x28] sm:$0xff]
    %v306 = vld [vmem:[#allocation8 + $0x30] sm:$0xff]
    %v307 = vld [vmem:[#allocation8 + $0x38] sm:$0xff]
    %v308 = vld [vmem:[#allocation8 + $0x40] sm:$0xff]
    %v309 = vld [vmem:[#allocation8 + $0x48] sm:$0xff]
    %v310 = vld [vmem:[#allocation8 + $0x50] sm:$0xff]
    %v311 = vld [vmem:[#allocation8 + $0x58] sm:$0xff]
    %v312 = vld [vmem:[#allocation8 + $0x60] sm:$0xff]
    %v313 = vld [vmem:[#allocation8 + $0x68] sm:$0xff]
    %v314 = vld [vmem:[#allocation8 + $0x70] sm:$0xff]
    %v315 = vld [vmem:[#allocation8 + $0x78] sm:$0xff]
    %v316 = vld [vmem:[%s6] sm:$0x1]
    %v318 = vlaneseq
    %v319 = vshrl.u32 %v318, 7
    %v320 = vsub.s32 0, %v319
    %v321 = vrot.slane %v316, %v320
    %323 = vmatprep.subr.mxu0 0.0
    %324 = vmatpush1.msra.mxu0 %v300
    %325 = vmatprep.subr.mxu0 0.0
    %326 = vmatpush1.msra.mxu0 %v301
    %327 = vmatprep.subr.mxu0 0.0
    %328 = vmatpush1.msra.mxu0 %v302
    %329 = vmatprep.subr.mxu0 0.0
    %330 = vmatpush1.msra.mxu0 %v303
    %331 = vmatprep.subr.mxu0 0.0
    %332 = vmatpush1.msra.mxu0 %v304
    %333 = vmatprep.subr.mxu0 0.0
    %334 = vmatpush1.msra.mxu0 %v305
    %335 = vmatprep.subr.mxu0 0.0
    %336 = vmatpush1.msra.mxu0 %v306
    %337 = vmatprep.subr.mxu0 0.0
    %338 = vmatpush1.msra.mxu0 %v307
    %339 = vmatprep.subr.mxu0 0.0
    %340 = vmatpush1.msra.mxu0 %v308
    %341 = vmatprep.subr.mxu0 0.0
    %342 = vmatpush1.msra.mxu0 %v309
    %343 = vmatprep.subr.mxu0 0.0
    %344 = vmatpush1.msra.mxu0 %v310
    %345 = vmatprep.subr.mxu0 0.0
    %346 = vmatpush1.msra.mxu0 %v311
    %347 = vmatprep.subr.mxu0 0.0
    %348 = vmatpush1.msra.mxu0 %v312
    %349 = vmatprep.subr.mxu0 0.0
    %350 = vmatpush1.msra.mxu0 %v313
    %351 = vmatprep.subr.mxu0 0.0
    %352 = vmatpush1.msra.mxu0 %v314
    %353 = vmatprep.subr.mxu0 0.0
    %354 = vmatpush1.msra.mxu0 %v315
    %355 = vmatprep.subr.mxu0 0.0
    %356 = vmatpush1.msra.mxu0 0.0
    %357 = vmatprep.subr.mxu0 0.0
    %358 = vmatpush1.msra.mxu0 0.0
    %359 = vmatprep.subr.mxu0 0.0
    %360 = vmatpush1.msra.mxu0 0.0
    %361 = vmatprep.subr.mxu0 0.0
    %362 = vmatpush1.msra.mxu0 0.0
    %363 = vmatprep.subr.mxu0 0.0
    %364 = vmatpush1.msra.mxu0 0.0
    %365 = vmatprep.subr.mxu0 0.0
    %366 = vmatpush1.msra.mxu0 0.0
    %367 = vmatprep.subr.mxu0 0.0
    %368 = vmatpush1.msra.mxu0 0.0
    %369 = vmatprep.subr.mxu0 0.0
    %370 = vmatpush1.msra.mxu0 0.0
    %371 = vmatprep.subr.mxu0 0.0
    %372 = vmatpush1.msra.mxu0 0.0
    %373 = vmatprep.subr.mxu0 0.0
    %374 = vmatpush1.msra.mxu0 0.0
    %375 = vmatprep.subr.mxu0 0.0
    %376 = vmatpush1.msra.mxu0 0.0
    %377 = vmatprep.subr.mxu0 0.0
    %378 = vmatpush1.msra.mxu0 0.0
    %379 = vmatprep.subr.mxu0 0.0
    %380 = vmatpush1.msra.mxu0 0.0
    %381 = vmatprep.subr.mxu0 0.0
    %382 = vmatpush1.msra.mxu0 0.0
    %383 = vmatprep.subr.mxu0 0.0
    %384 = vmatpush1.msra.mxu0 0.0
    %385 = vmatprep.subr.mxu0 0.0
    %386 = vmatpush1.msra.mxu0 0.0
    %387 = vmatprep.mubr.f32.mxu0 0.0
    %388 = vmatmul.mubr.f32.gmra.mrb[0].mxu0 %v299
    %v389 = vpop.f32.mrb[0].mxu0
    %v390 = vadd.f32 %v321, %v389
    %v391 = vpop.f32.mrb[0].mxu0
    %392 = vdwg.mxu0
    %v393 = vxor.u32 %v390, 2147483648
    %v394 = vmul.f32 %v393, 1.442695
    %v395 = vpow.pop %v394
    %v396 = vadd.f32 %v395, 1.0
    %v397 = vrcp.pop %v396
    %v398 = vmul.f32 1.0, %v397
    %v399 = vmul.f32 %v390, %v398
    %v400 = vld [vmem:[#allocation10] sm:$0xff]
    %v401 = vld [vmem:[#allocation10 + $0x8] sm:$0xff]
    %v402 = vld [vmem:[#allocation10 + $0x10] sm:$0xff]
    %v403 = vld [vmem:[#allocation10 + $0x18] sm:$0xff]
    %v404 = vld [vmem:[#allocation10 + $0x20] sm:$0xff]
    %v405 = vld [vmem:[#allocation10 + $0x28] sm:$0xff]
    %v406 = vld [vmem:[#allocation10 + $0x30] sm:$0xff]
    %v407 = vld [vmem:[#allocation10 + $0x38] sm:$0xff]
    %v408 = vld [vmem:[#allocation10 + $0x40] sm:$0xff]
    %v409 = vld [vmem:[#allocation10 + $0x48] sm:$0xff]
    %v410 = vld [vmem:[#allocation10 + $0x50] sm:$0xff]
    %v411 = vld [vmem:[#allocation10 + $0x58] sm:$0xff]
    %v412 = vld [vmem:[#allocation10 + $0x60] sm:$0xff]
    %v413 = vld [vmem:[#allocation10 + $0x68] sm:$0xff]
    %v414 = vld [vmem:[#allocation10 + $0x70] sm:$0xff]
    %v415 = vld [vmem:[#allocation10 + $0x78] sm:$0xff]
    %v416 = vld [vmem:[%s8] sm:$0x1]
    %v418 = vlaneseq
    %v419 = vshrl.u32 %v418, 7
    %v420 = vsub.s32 0, %v419
    %v421 = vrot.slane %v416, %v420
    %423 = vmatprep.subr.mxu0 0.0
    %424 = vmatpush1.msra.mxu0 %v400
    %425 = vmatprep.subr.mxu0 0.0
    %426 = vmatpush1.msra.mxu0 %v401
    %427 = vmatprep.subr.mxu0 0.0
    %428 = vmatpush1.msra.mxu0 %v402
    %429 = vmatprep.subr.mxu0 0.0
    %430 = vmatpush1.msra.mxu0 %v403
    %431 = vmatprep.subr.mxu0 0.0
    %432 = vmatpush1.msra.mxu0 %v404
    %433 = vmatprep.subr.mxu0 0.0
    %434 = vmatpush1.msra.mxu0 %v405
    %435 = vmatprep.subr.mxu0 0.0
    %436 = vmatpush1.msra.mxu0 %v406
    %437 = vmatprep.subr.mxu0 0.0
    %438 = vmatpush1.msra.mxu0 %v407
    %439 = vmatprep.subr.mxu0 0.0
    %440 = vmatpush1.msra.mxu0 %v408
    %441 = vmatprep.subr.mxu0 0.0
    %442 = vmatpush1.msra.mxu0 %v409
    %443 = vmatprep.subr.mxu0 0.0
    %444 = vmatpush1.msra.mxu0 %v410
    %445 = vmatprep.subr.mxu0 0.0
    %446 = vmatpush1.msra.mxu0 %v411
    %447 = vmatprep.subr.mxu0 0.0
    %448 = vmatpush1.msra.mxu0 %v412
    %449 = vmatprep.subr.mxu0 0.0
    %450 = vmatpush1.msra.mxu0 %v413
    %451 = vmatprep.subr.mxu0 0.0
    %452 = vmatpush1.msra.mxu0 %v414
    %453 = vmatprep.subr.mxu0 0.0
    %454 = vmatpush1.msra.mxu0 %v415
    %455 = vmatprep.subr.mxu0 0.0
    %456 = vmatpush1.msra.mxu0 0.0
    %457 = vmatprep.subr.mxu0 0.0
    %458 = vmatpush1.msra.mxu0 0.0
    %459 = vmatprep.subr.mxu0 0.0
    %460 = vmatpush1.msra.mxu0 0.0
    %461 = vmatprep.subr.mxu0 0.0
    %462 = vmatpush1.msra.mxu0 0.0
    %463 = vmatprep.subr.mxu0 0.0
    %464 = vmatpush1.msra.mxu0 0.0
    %465 = vmatprep.subr.mxu0 0.0
    %466 = vmatpush1.msra.mxu0 0.0
    %467 = vmatprep.subr.mxu0 0.0
    %468 = vmatpush1.msra.mxu0 0.0
    %469 = vmatprep.subr.mxu0 0.0
    %470 = vmatpush1.msra.mxu0 0.0
    %471 = vmatprep.subr.mxu0 0.0
    %472 = vmatpush1.msra.mxu0 0.0
    %473 = vmatprep.subr.mxu0 0.0
    %474 = vmatpush1.msra.mxu0 0.0
    %475 = vmatprep.subr.mxu0 0.0
    %476 = vmatpush1.msra.mxu0 0.0
    %477 = vmatprep.subr.mxu0 0.0
    %478 = vmatpush1.msra.mxu0 0.0
    %479 = vmatprep.subr.mxu0 0.0
    %480 = vmatpush1.msra.mxu0 0.0
    %481 = vmatprep.subr.mxu0 0.0
    %482 = vmatpush1.msra.mxu0 0.0
    %483 = vmatprep.subr.mxu0 0.0
    %484 = vmatpush1.msra.mxu0 0.0
    %485 = vmatprep.subr.mxu0 0.0
    %486 = vmatpush1.msra.mxu0 0.0
    %487 = vmatprep.mubr.f32.mxu0 0.0
    %488 = vmatmul.mubr.f32.gmra.mrb[0].mxu0 %v399
    %v489 = vpop.f32.mrb[0].mxu0
    %v490 = vadd.f32 %v421, %v489
    %v491 = vpop.f32.mrb[0].mxu0
    %492 = vdwg.mxu0
    %v493 = vtanh.pop %v490
    %494 = vst [vmem:[#allocation11] sm:$0xff] %v493
    // Predicated region
    $region58: #{tpu_custom_call.1} parent=1 // pred_check
      _
    $region59: #{tpu_custom_call.1} parent=1 // pred_check_branch
      %496 = sbr.rel (0) target = $region61
    $region60: #{tpu_custom_call.1} parent=1 // pred_region
      %s498 = ssub.s32 128, 128
      %499 = vsyncadd [#allocation4], %s498
      %s501 = sshll.u32 [#allocation11], 4
      %s502 = int_to_ptr.vmem [resolvable:$true] %s501
      %504 = dma.vmem_to_hbm [thread:$0]  %s502, 128, %s9, [#allocation4]
    $region61: #{tpu_custom_call.1} parent=1 // pred_fallthru
      _
    // Predicated region
    $region62: #{tpu_custom_call.1} parent=1 // pred_check
      _
    $region63: #{tpu_custom_call.1} parent=1 // pred_check_branch
      %506 = sbr.rel (0) target = $region65
    $region64: #{tpu_custom_call.1} parent=1 // pred_region
      %507 = dma.done [#allocation4], 128
    $region65: #{tpu_custom_call.1} parent=1 // pred_fallthru
      _
    %508 = vsyncpa [#allocation3], 1
    %509 = vsyncpa [#allocation6], 1
    %510 = vsyncpa [#allocation9], 1
    %511 = vsyncpa [#allocation4], 1

</llo_original>
